<compile_context>
chip_gen: v7x
topology: tpu7x:2x2x1
jax: 0.10.0
libtpu: 0.0.40
codegen_flags: <defaults>
</compile_context>

<pallas_src>
import math

import jax
import jax.numpy as jnp
from jax.experimental import pallas as pl
from jax.experimental.pallas import tpu as pltpu


def mixup_kernel(w_ref, x_ref, o_ref):
    """o[b] = x[b]*w[b] + x[B-1-b]*(1-w[b]) on one (B, T) feature tile.

    The batch flip is built in-register from static sublane slices, so the
    kernel streams exactly one input block and one output block per grid
    step -- no second (flipped) input stream and no broadcast weight stream.
    """
    B = x_ref.shape[0]
    x = x_ref[...].astype(jnp.float32)
    # flip(x, 0) without lax.rev: static slices + sublane concatenate.
    xf = jnp.concatenate([x[B - 1 - b:B - b, :] for b in range(B)], axis=0)
    w = w_ref[...]                      # (B, 1) f32, resident across the grid
    o_ref[...] = (x * w + xf * (1.0 - w)).astype(o_ref.dtype)


def _choose_tile(B, F, itemsize, target_bytes=2 * 1024 * 1024):
    """Lane tile: multiple of 128, sized so a (B, tile) block is ~2 MiB."""
    lanes = (target_bytes // max(1, B * itemsize)) // 128 * 128
    lanes = max(128, min(8192, lanes))
    # If the whole feature dim fits, use it (block dim == full array dim is
    # always legal, even when F is not a multiple of 128).
    return F if F <= lanes else lanes


def _mixup_pallas(x2d, w_col):
    """Blend a [B, F] array with its batch flip using per-sample weights."""
    B, F = x2d.shape
    tile = _choose_tile(B, F, x2d.dtype.itemsize)
    grid = (pl.cdiv(F, tile),)          # ragged last block handled by Pallas
    return pl.pallas_call(
        mixup_kernel,
        out_shape=jax.ShapeDtypeStruct((B, F), x2d.dtype),
        grid=grid,
        in_specs=[
            pl.BlockSpec((B, 1), lambda j: (0, 0)),     # weights (constant map)
            pl.BlockSpec((B, tile), lambda j: (0, j)),  # x feature tile
        ],
        out_specs=pl.BlockSpec((B, tile), lambda j: (0, j)),
        compiler_params=pltpu.CompilerParams(
            dimension_semantics=("parallel",),          # independent tiles
            vmem_limit_bytes=32 * 1024 * 1024,          # safe on v5e/v6e/v7x
        ),
    )(w_col, x2d)


def _blend(x, weights):
    """mixup blend of x with flip(x, 0); Pallas for large tensors, JAX for tiny."""
    B = x.shape[0]
    F = math.prod(x.shape[1:])
    if F >= 512:
        w_col = weights.reshape(B, 1).astype(jnp.float32)
        return _mixup_pallas(x.reshape(B, F), w_col).reshape(x.shape)
    # Tiny feature dims (e.g. class targets): a dedicated pallas_call is pure
    # launch/pipeline overhead with under-filled vregs; let XLA fuse it.
    w = weights.reshape((B,) + (1,) * (x.ndim - 1)).astype(jnp.float32)
    return (x.astype(jnp.float32) * w
            + x[::-1].astype(jnp.float32) * (1.0 - w)).astype(x.dtype)


def mixup(data, targets, weights):
    """Pallas-backed equivalent of the PyTorch `mixup` function.

    data:    [B, C, H, W]
    targets: any [B, ...] shape broadcast-compatible with (B, 1, 1, 1)
    weights: [B] per-sample Beta samples
    """
    return _blend(data, weights), _blend(targets, weights)


class ImprovedYOLOv5:
    """JAX/Pallas port of the (partially defined) PyTorch module."""

    def __init__(self, num_classes, input_channels=3, anchors=None):
        self.num_classes = num_classes
        self.input_channels = input_channels
        self.anchor_boxes = anchors  # anchors kept as plain tuples
        self.alpha = 0.5
        self.is_mixup_enabled = True
        self.training = True

    def forward(self, x, targets, key):
        B = x.shape[0]
        # weights ~ Beta(alpha, alpha), one per sample; deterministic via key.
        weights = jax.random.beta(
            key, self.alpha, self.alpha, shape=(B,), dtype=jnp.float32)
        mixed_x, mixed_targets = mixup(x, targets, weights)
        # TODO(synk): self.predict / self.compute_loss reference undefined
        # symbols (`predictions`, `loss`, `outputs`, backbone weights) in the
        # source module, so no loss head can be faithfully implemented; the
        # mixup hot path (the only concrete compute) returns its results here.
        loss = None
        outputs = (mixed_x, mixed_targets)
        return loss, outputs


if __name__ == "__main__":
    key = jax.random.PRNGKey(0)
    k_x, k_t, k_w = jax.random.split(key, 3)

    B, C, H, W = 2, 4, 16, 16
    NUM_CLASSES = 8

    x = jax.random.normal(k_x, (B, C, H, W), dtype=jnp.float32)
    # targets shaped [B, 1, 1, num_classes] so it broadcasts against (B,1,1,1)
    # exactly like in the PyTorch code.
    targets = jax.random.uniform(k_t, (B, 1, 1, NUM_CLASSES), dtype=jnp.float32)

    model = ImprovedYOLOv5(num_classes=NUM_CLASSES, input_channels=C)
    loss, (mixed_x, mixed_t) = model.forward(x, targets, k_w)
    jax.block_until_ready((mixed_x, mixed_t))

    # reference check against plain-JAX mixup
    w = jax.random.beta(k_w, model.alpha, model.alpha, shape=(B,),
                        dtype=jnp.float32).reshape(B, 1, 1, 1)
    ref_x = x * w + x[::-1] * (1.0 - w)
    ref_t = targets * w + targets[::-1] * (1.0 - w)
    assert jnp.allclose(mixed_x, ref_x, atol=1e-6, rtol=1e-6)
    assert jnp.allclose(mixed_t, ref_t, atol=1e-6, rtol=1e-6)

    print("KERNEL_OK")
</pallas_src>

<mosaic_0001>
module attributes {stable_mosaic.version = 11 : i64} {
  func.func @mixup_kernel(%arg0: i32, %arg1: memref<2x1xf32, #tpu.memory_space<vmem>>, %arg2: memref<2x1024xf32, #tpu.memory_space<vmem>>, %arg3: memref<2x1024xf32, #tpu.memory_space<vmem>>) attributes {dimension_semantics = [#tpu.dimension_semantics<parallel>], iteration_bounds = array<i64: 1>, scalar_prefetch = 0 : i64, scratch_operands = 0 : i64, tpu.core_type = #tpu.core_type<tc>, window_params = [{pipeline_mode = #tpu.pipeline_mode<synchronous>, transform_indices = @transform_0, window_bounds = array<i64: 2, 1>}, {transform_indices = @transform_1, window_bounds = array<i64: 2, 1024>}, {transform_indices = @transform_2, window_bounds = array<i64: 2, 1024>}]} {
    %c0 = arith.constant 0 : index
    %c0_0 = arith.constant 0 : index
    %0 = vector.load %arg2[%c0, %c0_0] : memref<2x1024xf32, #tpu.memory_space<vmem>>, vector<2x1024xf32>
    %1 = vector.extract_strided_slice %0 {offsets = [1, 0], sizes = [1, 1024], strides = [1, 1]} : vector<2x1024xf32> to vector<1x1024xf32>
    %2 = vector.extract_strided_slice %0 {offsets = [0, 0], sizes = [1, 1024], strides = [1, 1]} : vector<2x1024xf32> to vector<1x1024xf32>
    %3 = tpu.concatenate %1, %2 in 0 : vector<1x1024xf32>, vector<1x1024xf32> -> vector<2x1024xf32>
    %c0_1 = arith.constant 0 : index
    %c0_2 = arith.constant 0 : index
    %4 = vector.load %arg1[%c0_1, %c0_2] : memref<2x1xf32, #tpu.memory_space<vmem>>, vector<2x1xf32>
    %5 = vector.broadcast %4 : vector<2x1xf32> to vector<2x1024xf32>
    %6 = arith.mulf %0, %5 : vector<2x1024xf32>
    %cst = arith.constant 1.000000e+00 : f32
    %7 = vector.broadcast %cst : f32 to vector<2x1xf32>
    %8 = arith.subf %7, %4 : vector<2x1xf32>
    %9 = vector.broadcast %8 : vector<2x1xf32> to vector<2x1024xf32>
    %10 = arith.mulf %3, %9 : vector<2x1024xf32>
    %11 = arith.addf %6, %10 : vector<2x1024xf32>
    %c0_3 = arith.constant 0 : index
    %c0_4 = arith.constant 0 : index
    %12 = vector.load %arg3[%c0_3, %c0_4] : memref<2x1024xf32, #tpu.memory_space<vmem>>, vector<2x1024xf32>
    tpu.vector_store %arg3[%c0_3, %c0_4], %11 {strides = array<i32>} : memref<2x1024xf32, #tpu.memory_space<vmem>>, vector<2x1024xf32>,
    return
  }
  func.func @transform_0(%arg0: i32) -> (i32, i32) {
    %c0_i32 = arith.constant 0 : i32
    %c0_i32_0 = arith.constant 0 : i32
    %c0_i32_1 = arith.constant 0 : i32
    return %c0_i32, %c0_i32_0 : i32, i32
  }
  func.func @transform_1(%arg0: i32) -> (i32, i32) {
    %c0_i32 = arith.constant 0 : i32
    %c0_i32_0 = arith.constant 0 : i32
    return %c0_i32, %arg0 : i32, i32
  }
  func.func @transform_2(%arg0: i32) -> (i32, i32) {
    %c0_i32 = arith.constant 0 : i32
    %c0_i32_0 = arith.constant 0 : i32
    return %c0_i32, %arg0 : i32, i32
  }
}

</mosaic_0001>

<llo_original>
// kernel: tpu_custom_call.1
$region0: #{tpu_custom_call.1}
  #allocation0 [shape = 'u32[]', space=smem, size = 0x4, offset = 0x4, fixed_abs, tag = 'smem constant byte address 0x4 - core index']
  #allocation1 [shape = 'u32[144,128]{1,0:T(1,128)}', space=vmem, size = 0x12000, scoped, tag = 'internal scratch']
  %s0 = inlined_call_operand.vmem [shape: f32[2,1], index: 0, kind: input, shape index: {}]
  %s1 = inlined_call_operand.hbm [shape: f32[2,1024], index: 1, kind: input, shape index: {}]
  %s2 = inlined_call_operand.hbm [shape: f32[2,1024], index: 2, kind: output, shape index: {}]
  %s3 = sld [smem:[#allocation0]]
  $region22: #{tpu_custom_call.1} parent=0
    _
  %s5 = ssub.s32 1, %s3
  %s6 = scalar_select 0, %s5, %s3
  $region1: #{tpu_custom_call.1} parent=0
    #allocation2 [shape = 'u8[8192]{0}', space=vmem, size = 0x2000, scoped, tag = 'input window, operand 1, single buffered']
    #allocation3 [shape = 's32[1]{0}', space=sflag, size = 0x4, scoped, tag = 'scoped memory for tpu_custom_call.1']
    #allocation4 [shape = 's32[1]{0}', space=sflag, size = 0x4, scoped, tag = 'scoped memory for tpu_custom_call.1']
    #allocation5 [shape = 'u8[8192]{0}', space=vmem, size = 0x2000, scoped, tag = 'output window, operand 0, single buffered']
    %7 = vsyncpa [#allocation3], 0
    %8 = vsyncpa [#allocation4], 0
    // Predicated region
    $region2: #{tpu_custom_call.1} parent=1 // pred_check
      _
    $region3: #{tpu_custom_call.1} parent=1 // pred_check_branch
      %10 = sbr.rel (0) target = $region5
    $region4: #{tpu_custom_call.1} parent=1 // pred_region
      _
    $region5: #{tpu_custom_call.1} parent=1 // pred_fallthru
      _
    // Predicated region
    $region6: #{tpu_custom_call.1} parent=1 // pred_check
      _
    $region7: #{tpu_custom_call.1} parent=1 // pred_check_branch
      %12 = sbr.rel (0) target = $region9
    $region8: #{tpu_custom_call.1} parent=1 // pred_region
      %s14 = ssub.s32 256, 256
      %15 = vsyncadd [#allocation3], %s14
      %s17 = sshll.u32 [#allocation2], 4
      %s18 = int_to_ptr.vmem [resolvable:$true] %s17
      %20 = dma.hbm_to_vmem [thread:$0]  %s1, 256, %s18, [#allocation3]
    $region9: #{tpu_custom_call.1} parent=1 // pred_fallthru
      _
    // Predicated region
    $region10: #{tpu_custom_call.1} parent=1 // pred_check
      _
    $region11: #{tpu_custom_call.1} parent=1 // pred_check_branch
      %22 = sbr.rel (0) target = $region13
    $region12: #{tpu_custom_call.1} parent=1 // pred_region
      %23 = dma.done [#allocation3], 256
    $region13: #{tpu_custom_call.1} parent=1 // pred_fallthru
      _
    %v24 = vld [vmem:[#allocation2] sm:$0xff]
    %v25 = vld [vmem:[#allocation2 + $0x8] sm:$0xff]
    %v28 = vlaneseq
    %v29 = vshrl.u32 %v28, 7
    %v30 = vsub.s32 1, %v29
    %v31 = vrot.slane %v24, %v30
    %v32 = vlaneseq
    %v33 = vshrl.u32 %v32, 7
    %v34 = vsub.s32 3, %v33
    %v35 = vrot.slane %v24, %v34
    %v36 = vlaneseq
    %v37 = vshrl.u32 %v36, 7
    %v38 = vsub.s32 5, %v37
    %v39 = vrot.slane %v24, %v38
    %v40 = vlaneseq
    %v41 = vshrl.u32 %v40, 7
    %v42 = vsub.s32 7, %v41
    %v43 = vrot.slane %v24, %v42
    %v44 = vlaneseq
    %v45 = vshrl.u32 %v44, 7
    %v46 = vsub.s32 1, %v45
    %v47 = vrot.slane %v25, %v46
    %v48 = vlaneseq
    %v49 = vshrl.u32 %v48, 7
    %v50 = vsub.s32 3, %v49
    %v51 = vrot.slane %v25, %v50
    %v52 = vlaneseq
    %v53 = vshrl.u32 %v52, 7
    %v54 = vsub.s32 5, %v53
    %v55 = vrot.slane %v25, %v54
    %v56 = vlaneseq
    %v57 = vshrl.u32 %v56, 7
    %v58 = vsub.s32 7, %v57
    %v59 = vrot.slane %v25, %v58
    %v68 = vlaneseq
    %v69 = vshrl.u32 %v68, 7
    %v70 = vsub.s32 0, %v69
    %v71 = vrot.slane %v24, %v70
    %v72 = vlaneseq
    %v73 = vshrl.u32 %v72, 7
    %v74 = vsub.s32 2, %v73
    %v75 = vrot.slane %v24, %v74
    %v76 = vlaneseq
    %v77 = vshrl.u32 %v76, 7
    %v78 = vsub.s32 4, %v77
    %v79 = vrot.slane %v24, %v78
    %v80 = vlaneseq
    %v81 = vshrl.u32 %v80, 7
    %v82 = vsub.s32 6, %v81
    %v83 = vrot.slane %v24, %v82
    %v84 = vlaneseq
    %v85 = vshrl.u32 %v84, 7
    %v86 = vsub.s32 0, %v85
    %v87 = vrot.slane %v25, %v86
    %v88 = vlaneseq
    %v89 = vshrl.u32 %v88, 7
    %v90 = vsub.s32 2, %v89
    %v91 = vrot.slane %v25, %v90
    %v92 = vlaneseq
    %v93 = vshrl.u32 %v92, 7
    %v94 = vsub.s32 4, %v93
    %v95 = vrot.slane %v25, %v94
    %v96 = vlaneseq
    %v97 = vshrl.u32 %v96, 7
    %v98 = vsub.s32 6, %v97
    %v99 = vrot.slane %v25, %v98
    %vm108 = vcmask 1040384
    %v109 = vsel %vm108, %v31, %v71
    %v110 = vsel %vm108, %v35, %v75
    %v111 = vsel %vm108, %v39, %v79
    %v112 = vsel %vm108, %v43, %v83
    %v113 = vsel %vm108, %v47, %v87
    %v114 = vsel %vm108, %v51, %v91
    %v115 = vsel %vm108, %v55, %v95
    %v116 = vsel %vm108, %v59, %v99
    %v117 = vld [vmem:[%s0] sm:$0x3]
    %119 = vset.pattern.permute.xlu0 0
    %120 = vperm.xlu0 %119, %v117
    %v121 = vpop.permute.xlu0 %120
    %v123 = vunpack.c.l.s4 269488144
    %v124 = vunpack.c.0.s8 %v123
    %v125 = vlaneseq
    %v126 = vshrl.u32 %v125, 7
    %v127 = vsub.s32 %v124, %v126
    %v128 = vrot.slane %v121, %v127
    %v130 = vmul.f32 %v24, %v128
    %v131 = vmul.f32 %v25, %v128
    %v132 = vsub.f32 1.0, %v117
    %134 = vset.pattern.permute.xlu0 0
    %135 = vperm.xlu0 %134, %v132
    %v136 = vpop.permute.xlu0 %135
    %v138 = vmul.f32 %v109, %v136
    %v139 = vmul.f32 %v110, %v136
    %v140 = vmul.f32 %v111, %v136
    %v141 = vmul.f32 %v112, %v136
    %v142 = vmul.f32 %v113, %v136
    %v143 = vmul.f32 %v114, %v136
    %v144 = vmul.f32 %v115, %v136
    %v145 = vmul.f32 %v116, %v136
    %v154 = vcombine.low %v138, %v139
    %v155 = vcombine.low %v140, %v141
    %v157 = vunpack.c.l.s4 1983009808
    %v158 = vunpack.c.0.s8 %v157
    %v159 = vlaneseq
    %v160 = vshrl.u32 %v159, 7
    %v161 = vsub.s32 %v158, %v160
    %v162 = vrot.slane %v154, %v161
    %v164 = vunpack.c.l.s4 1983009808
    %v165 = vunpack.c.0.s8 %v164
    %v166 = vlaneseq
    %v167 = vshrl.u32 %v166, 7
    %v168 = vsub.s32 %v165, %v167
    %v169 = vrot.slane %v155, %v168
    %v170 = vcombine.low %v162, %v169
    %v171 = vcombine.low %v142, %v143
    %v172 = vcombine.low %v144, %v145
    %v174 = vunpack.c.l.s4 1983009808
    %v175 = vunpack.c.0.s8 %v174
    %v176 = vlaneseq
    %v177 = vshrl.u32 %v176, 7
    %v178 = vsub.s32 %v175, %v177
    %v179 = vrot.slane %v171, %v178
    %v181 = vunpack.c.l.s4 1983009808
    %v182 = vunpack.c.0.s8 %v181
    %v183 = vlaneseq
    %v184 = vshrl.u32 %v183, 7
    %v185 = vsub.s32 %v182, %v184
    %v186 = vrot.slane %v172, %v185
    %v187 = vcombine.low %v179, %v186
    %v190 = vadd.f32 %v130, %v170
    %v191 = vadd.f32 %v131, %v187
    %192 = vst [vmem:[#allocation5] sm:$0xff] %v190
    %193 = vst [vmem:[#allocation5 + $0x8] sm:$0xff] %v191
    // Predicated region
    $region14: #{tpu_custom_call.1} parent=1 // pred_check
      _
    $region15: #{tpu_custom_call.1} parent=1 // pred_check_branch
      %195 = sbr.rel (0) target = $region17
    $region16: #{tpu_custom_call.1} parent=1 // pred_region
      %s197 = ssub.s32 256, 256
      %198 = vsyncadd [#allocation4], %s197
      %s200 = sshll.u32 [#allocation5], 4
      %s201 = int_to_ptr.vmem [resolvable:$true] %s200
      %203 = dma.vmem_to_hbm [thread:$0]  %s201, 256, %s2, [#allocation4]
    $region17: #{tpu_custom_call.1} parent=1 // pred_fallthru
      _
    // Predicated region
    $region18: #{tpu_custom_call.1} parent=1 // pred_check
      _
    $region19: #{tpu_custom_call.1} parent=1 // pred_check_branch
      %205 = sbr.rel (0) target = $region21
    $region20: #{tpu_custom_call.1} parent=1 // pred_region
      %206 = dma.done [#allocation4], 256
    $region21: #{tpu_custom_call.1} parent=1 // pred_fallthru
      _
    %207 = vsyncpa [#allocation3], 1
    %208 = vsyncpa [#allocation4], 1

</llo_original>
